<compile_context>
chip_gen: v5e
topology: v5e:2x2
jax: 0.10.0
libtpu: 0.0.40
codegen_flags: <defaults>
</compile_context>

<pallas_src>
import numpy as np
import jax
import jax.numpy as jnp
from jax import lax
from jax.experimental import pallas as pl
from jax.experimental.pallas import tpu as pltpu

MASK_CONST = -1.0e8   # CategoricalMasked.masking_constant
NEG_BIG = -1.0e9      # per-segment "not in segment" fill for max reductions
LANE = 128
SUBL = 32             # batch-tile sublane quantum


def _round_up(x, m):
    return ((int(x) + m - 1) // m) * m


def _make_actor_kernel(widths, starts, a_total, n_comp, TB, A_PAD, OUT_PAD):
    def kernel(x_ref, mb_ref, g_ref,
               w1_ref, b1_ref, w2_ref, b2_ref, w3_ref, b3_ref,
               seg_ref, loc_ref, out_ref):
        f32 = jnp.float32

        # ---- 3-layer MLP: bf16 MXU operands, f32 accumulate / elementwise ----
        x = x_ref[...]                                            # (TB, S_PAD)
        h1 = jnp.maximum(jnp.dot(x.astype(jnp.bfloat16), w1_ref[...],
                                 preferred_element_type=f32) + b1_ref[...], 0.0)
        h2 = jnp.maximum(jnp.dot(h1.astype(jnp.bfloat16), w2_ref[...],
                                 preferred_element_type=f32) + b2_ref[...], 0.0)
        logits = (jnp.dot(h2.astype(jnp.bfloat16), w3_ref[...],
                          preferred_element_type=f32) + b3_ref[...])

        # Additive mask bias: 0 on valid lanes, ~-1e8 on invalid / padded lanes.
        logits = logits + mb_ref[...].astype(f32)                 # (TB, A_PAD)

        lane = lax.broadcasted_iota(jnp.int32, (TB, A_PAD), 1)
        # Gumbel-max scores with a tiny eps*lane deterministic tie-break.
        scores = logits + g_ref[...] - 1.0e-6 * lane.astype(f32)

        # Per-segment max broadcasts (softmax stabilizer & argmax reference).
        # Small static loop over the few MultiDiscrete components; everything
        # works on the full lane-padded tile -> no sub-128 slices.
        seg_max_b = jnp.zeros((TB, A_PAD), f32)
        smax_b = jnp.zeros((TB, A_PAD), f32)
        for s, n in zip(starts, widths):
            in_seg = (lane >= s) & (lane < s + n)
            m_c = jnp.max(jnp.where(in_seg, logits, NEG_BIG), -1, keepdims=True)
            seg_max_b = jnp.where(in_seg, m_c, seg_max_b)
            sm_c = jnp.max(jnp.where(in_seg, scores, NEG_BIG), -1, keepdims=True)
            smax_b = jnp.where(in_seg, sm_c, smax_b)

        z = logits - seg_max_b                  # per-segment shifted logits
        e = jnp.exp(z)                          # the ONE full-tile exp (EUP)
        winner = ((lane < a_total) & (scores >= smax_b)).astype(f32)

        # Segment reductions via the one-hot lane->component matrix on the MXU.
        seg = seg_ref[...]                                       # (A_PAD, OUT_PAD)
        sums = jnp.dot(e, seg, preferred_element_type=f32)       # sum_c exp(z)
        ez_sums = jnp.dot(e * z, seg, preferred_element_type=f32)  # sum_c exp*z
        acts = jnp.dot(winner * loc_ref[...], seg,               # local index
                       preferred_element_type=f32)               # (TB, OUT_PAD)

        sums = jnp.maximum(sums, 1e-30)
        lse = jnp.log(sums)                                      # per-component
        comp = lax.broadcasted_iota(jnp.int32, (TB, OUT_PAD), 1)
        lse = jnp.where(comp < n_comp, lse, 0.0)   # drop padded components

        # logprob = sum_c (z_winner_c - lse_c)
        # entropy = sum_c (lse_c - E_softmax[z]_c)
        wz_row = jnp.sum(winner * z, -1, keepdims=True)
        lse_row = jnp.sum(lse, -1, keepdims=True)
        ez_row = jnp.sum(ez_sums / sums, -1, keepdims=True)

        lp = wz_row - lse_row                                    # (TB, 1)
        ent = lse_row - ez_row                                   # (TB, 1)

        # Single packed lane-dense output: actions in lanes [0, n_comp),
        # logprob in lane n_comp, entropy in lane n_comp + 1.
        packed = jnp.where(comp == n_comp, lp, acts)
        packed = jnp.where(comp == n_comp + 1, ent, packed)
        out_ref[...] = packed

    return kernel


def prepare_actor(params, state_dim, hidden_dim, action_space):
    """Pad / bf16-cast parameters and build constant segment matrices ONCE
    (hoisted out of the per-step forward path)."""
    widths = [int(n) for n in action_space]
    n_comp = len(widths)
    starts = np.concatenate([[0], np.cumsum(widths)])[:-1].astype(int).tolist()
    a_total = int(sum(widths))

    S_PAD = _round_up(state_dim, LANE)
    H_PAD = _round_up(hidden_dim, LANE)
    A_PAD = _round_up(a_total, LANE)
    OUT_PAD = _round_up(n_comp + 2, LANE)

    def pad2(a, rows, cols, dtype):
        a = jnp.asarray(a, jnp.float32)
        return jnp.pad(a, ((0, rows - a.shape[0]), (0, cols - a.shape[1]))).astype(dtype)

    # One-hot lane -> component matrix and per-lane local index row.
    seg = np.zeros((A_PAD, OUT_PAD), np.float32)
    loc = np.zeros((1, A_PAD), np.float32)
    for c, (s, n) in enumerate(zip(starts, widths)):
        seg[s:s + n, c] = 1.0
        loc[0, s:s + n] = np.arange(n, dtype=np.float32)

    return dict(
        widths=widths, starts=starts, n_comp=n_comp, a_total=a_total,
        S_PAD=S_PAD, H_PAD=H_PAD, A_PAD=A_PAD, OUT_PAD=OUT_PAD,
        state_dim=int(state_dim),
        w1=pad2(params["w1"], S_PAD, H_PAD, jnp.bfloat16),
        b1=pad2(params["b1"], 1, H_PAD, jnp.float32),
        w2=pad2(params["w2"], H_PAD, H_PAD, jnp.bfloat16),
        b2=pad2(params["b2"], 1, H_PAD, jnp.float32),
        w3=pad2(params["w3"], H_PAD, A_PAD, jnp.bfloat16),
        b3=pad2(params["b3"], 1, A_PAD, jnp.float32),
        seg=jnp.asarray(seg), loc=jnp.asarray(loc),
    )


def multi_discrete_actor_forward(state, action_mask, prep, rng_key):
    """Forward pass: returns (action [B, n_comp], logprob [B], entropy [B])."""
    B, state_dim = state.shape
    assert state_dim == prep["state_dim"]
    n_comp, a_total = prep["n_comp"], prep["a_total"]
    S_PAD, H_PAD = prep["S_PAD"], prep["H_PAD"]
    A_PAD, OUT_PAD = prep["A_PAD"], prep["OUT_PAD"]

    # Batch tile: multiple of 32 sublanes (native for f32/bf16/int8), capped at
    # 128 to keep vreg pressure of the softmax/sampling epilogue bounded.
    TB = min(128, _round_up(B, SUBL))
    B_PAD = _round_up(B, TB)
    grid = (B_PAD // TB,)

    x_p = jnp.pad(jnp.asarray(state, jnp.float32),
                  ((0, B_PAD - B), (0, S_PAD - state_dim)))
    mask = jnp.pad(jnp.asarray(action_mask, jnp.bool_),
                   ((0, B_PAD - B), (0, A_PAD - a_total)))
    # bf16 additive mask bias: half the mask DMA bytes, no in-kernel compare.
    mask_bias = jnp.where(mask, 0.0, MASK_CONST).astype(jnp.bfloat16)
    # Gumbel noise from a jax.random key (TODO(synk): could use the on-chip
    # pltpu PRNG on real TPU, but it has no interpret/CPU lowering).
    gumbel = jax.random.gumbel(rng_key, (B_PAD, A_PAD), dtype=jnp.float32)

    kernel = _make_actor_kernel(prep["widths"], prep["starts"], a_total,
                                n_comp, TB, A_PAD, OUT_PAD)

    tiled = lambda bs: pl.BlockSpec(bs, lambda i: (i, 0))          # batch-tiled
    resident = lambda bs: pl.BlockSpec(bs, lambda i: (0, 0),       # VMEM-resident
                                       pipeline_mode=pl.Buffered(1))

    out = pl.pallas_call(
        kernel,
        out_shape=jax.ShapeDtypeStruct((B_PAD, OUT_PAD), jnp.float32),
        grid=grid,
        in_specs=[
            tiled((TB, S_PAD)),                  # state tile
            tiled((TB, A_PAD)),                  # additive mask bias (bf16)
            tiled((TB, A_PAD)),                  # gumbel noise
            resident((S_PAD, H_PAD)), resident((1, H_PAD)),
            resident((H_PAD, H_PAD)), resident((1, H_PAD)),
            resident((H_PAD, A_PAD)), resident((1, A_PAD)),
            resident((A_PAD, OUT_PAD)),          # one-hot lane->component
            resident((1, A_PAD)),                # per-lane local index
        ],
        out_specs=tiled((TB, OUT_PAD)),          # packed actions|logprob|entropy
        compiler_params=pltpu.CompilerParams(
            dimension_semantics=("parallel",)),  # megacore shards batch tiles
    )(x_p, mask_bias, gumbel,
      prep["w1"], prep["b1"], prep["w2"], prep["b2"], prep["w3"], prep["b3"],
      prep["seg"], prep["loc"])

    action = jnp.round(out[:B, :n_comp]).astype(jnp.int32)
    logprob = out[:B, n_comp]
    entropy = out[:B, n_comp + 1]
    return action, logprob, entropy


def init_params(key, state_dim, hidden_dim, action_space):
    """Orthogonal init matching init_layer(std=sqrt(2), bias=0); head std=1."""
    a_total = int(sum(int(n) for n in action_space))
    k1, k2, k3 = jax.random.split(key, 3)
    ortho = jax.nn.initializers.orthogonal
    return {
        "w1": ortho(float(np.sqrt(2)))(k1, (state_dim, hidden_dim), jnp.float32),
        "b1": jnp.zeros((1, hidden_dim), jnp.float32),
        "w2": ortho(float(np.sqrt(2)))(k2, (hidden_dim, hidden_dim), jnp.float32),
        "b2": jnp.zeros((1, hidden_dim), jnp.float32),
        "w3": ortho(1.0)(k3, (hidden_dim, a_total), jnp.float32),
        "b3": jnp.zeros((1, a_total), jnp.float32),
    }


def _reference_lp_ent(state, params, mask_bool, action_space, action):
    """Pure-JAX reference (same bf16 matmul pipeline) for logprob/entropy."""
    bf = jnp.bfloat16
    h1 = jax.nn.relu(jnp.dot(state.astype(bf), params["w1"].astype(bf),
                             preferred_element_type=jnp.float32) + params["b1"])
    h2 = jax.nn.relu(jnp.dot(h1.astype(bf), params["w2"].astype(bf),
                             preferred_element_type=jnp.float32) + params["b2"])
    logits = (jnp.dot(h2.astype(bf), params["w3"].astype(bf),
                      preferred_element_type=jnp.float32) + params["b3"])
    logits = jnp.where(mask_bool, logits, MASK_CONST)
    lp = jnp.zeros((state.shape[0],), jnp.float32)
    ent = jnp.zeros((state.shape[0],), jnp.float32)
    s = 0
    for c, n in enumerate(int(v) for v in action_space):
        lg, mk = logits[:, s:s + n], mask_bool[:, s:s + n]
        logp = jax.nn.log_softmax(lg, axis=-1)
        p = jnp.exp(logp)
        lp = lp + jnp.take_along_axis(logp, action[:, c:c + 1], axis=-1)[:, 0]
        ent = ent - jnp.sum(jnp.where(mk, logp * p, 0.0), axis=-1)
        s += n
    return lp, ent


def _check(state, params, mask, action_space, action, logprob, entropy):
    B = state.shape[0]
    starts = np.concatenate([[0], np.cumsum(action_space)])[:-1]
    act_np, mask_np = np.asarray(action), np.asarray(mask)
    assert action.shape == (B, len(action_space))
    assert logprob.shape == (B,) and entropy.shape == (B,)
    for c, s in enumerate(starts):
        n = int(action_space[c])
        assert np.all((act_np[:, c] >= 0) & (act_np[:, c] < n))
        assert np.all(mask_np[np.arange(B), int(s) + act_np[:, c]])
    assert np.all(np.asarray(logprob) <= 1e-4)
    assert np.all(np.asarray(entropy) >= -1e-4)
    lp_ref, ent_ref = _reference_lp_ent(state, params, mask, action_space, action)
    np.testing.assert_allclose(np.asarray(logprob), np.asarray(lp_ref),
                               rtol=2e-2, atol=2e-2)
    np.testing.assert_allclose(np.asarray(entropy), np.asarray(ent_ref),
                               rtol=2e-2, atol=2e-2)


if __name__ == "__main__":
    STATE_DIM = 16
    HIDDEN = 32
    ACTION_SPACE = np.array([3, 5, 4])             # MultiDiscrete nvec, sum = 12
    A_TOTAL = int(ACTION_SPACE.sum())
    STARTS = np.concatenate([[0], np.cumsum(ACTION_SPACE)])[:-1]

    root = jax.random.PRNGKey(0)
    k_params, k_rest = jax.random.split(root)
    params = init_params(k_params, STATE_DIM, HIDDEN, ACTION_SPACE)
    prep = prepare_actor(params, STATE_DIM, HIDDEN, ACTION_SPACE)

    def make_inputs(key, B):
        ks, km = jax.random.split(key)
        state = jax.random.normal(ks, (B, STATE_DIM), dtype=jnp.float32)
        # Random mask; guarantee at least one valid action per component.
        # (np.array makes a WRITABLE copy of the JAX array.)
        mask = np.array(jax.random.bernoulli(km, p=0.7, shape=(B, A_TOTAL)))
        for s in STARTS:
            mask[:, int(s)] = True
        return state, jnp.asarray(mask)

    # TODO(synk): the `action is None` unmasked branch and externally-provided
    # `action` evaluation path are not exposed; the masked/sample path covers
    # the full compute graph (an all-True mask reduces to the unmasked case).

    # Small batch (single grid step).
    k_in1, k_noise1, k_in2, k_noise2 = jax.random.split(k_rest, 4)
    state1, mask1 = make_inputs(k_in1, 4)
    a1, lp1, e1 = multi_discrete_actor_forward(state1, mask1, prep, k_noise1)
    jax.block_until_ready((a1, lp1, e1))
    _check(state1, params, mask1, ACTION_SPACE, a1, lp1, e1)

    # Larger batch exercising the multi-tile grid + batch padding path.
    state2, mask2 = make_inputs(k_in2, 160)
    a2, lp2, e2 = multi_discrete_actor_forward(state2, mask2, prep, k_noise2)
    jax.block_until_ready((a2, lp2, e2))
    _check(state2, params, mask2, ACTION_SPACE, a2, lp2, e2)

    print("KERNEL_OK")
</pallas_src>

<mosaic_0001>
module attributes {stable_mosaic.version = 11 : i64} {
  func.func @kernel(%arg0: i32, %arg1: memref<32x128xf32, #tpu.memory_space<vmem>>, %arg2: memref<32x128xbf16, #tpu.memory_space<vmem>>, %arg3: memref<32x128xf32, #tpu.memory_space<vmem>>, %arg4: memref<128x128xbf16, #tpu.memory_space<vmem>>, %arg5: memref<1x128xf32, #tpu.memory_space<vmem>>, %arg6: memref<128x128xbf16, #tpu.memory_space<vmem>>, %arg7: memref<1x128xf32, #tpu.memory_space<vmem>>, %arg8: memref<128x128xbf16, #tpu.memory_space<vmem>>, %arg9: memref<1x128xf32, #tpu.memory_space<vmem>>, %arg10: memref<128x128xf32, #tpu.memory_space<vmem>>, %arg11: memref<1x128xf32, #tpu.memory_space<vmem>>, %arg12: memref<32x128xf32, #tpu.memory_space<vmem>>) attributes {dimension_semantics = [#tpu.dimension_semantics<parallel>], iteration_bounds = array<i64: 1>, scalar_prefetch = 0 : i64, scratch_operands = 0 : i64, tpu.core_type = #tpu.core_type<tc>, window_params = [{transform_indices = @transform_0, window_bounds = array<i64: 32, 128>}, {transform_indices = @transform_1, window_bounds = array<i64: 32, 128>}, {transform_indices = @transform_2, window_bounds = array<i64: 32, 128>}, {pipeline_mode = #tpu.pipeline_mode<synchronous>, transform_indices = @transform_3, window_bounds = array<i64: 128, 128>}, {pipeline_mode = #tpu.pipeline_mode<synchronous>, transform_indices = @transform_4, window_bounds = array<i64: 1, 128>}, {pipeline_mode = #tpu.pipeline_mode<synchronous>, transform_indices = @transform_5, window_bounds = array<i64: 128, 128>}, {pipeline_mode = #tpu.pipeline_mode<synchronous>, transform_indices = @transform_6, window_bounds = array<i64: 1, 128>}, {pipeline_mode = #tpu.pipeline_mode<synchronous>, transform_indices = @transform_7, window_bounds = array<i64: 128, 128>}, {pipeline_mode = #tpu.pipeline_mode<synchronous>, transform_indices = @transform_8, window_bounds = array<i64: 1, 128>}, {pipeline_mode = #tpu.pipeline_mode<synchronous>, transform_indices = @transform_9, window_bounds = array<i64: 128, 128>}, {pipeline_mode = #tpu.pipeline_mode<synchronous>, transform_indices = @transform_10, window_bounds = array<i64: 1, 128>}, {transform_indices = @transform_11, window_bounds = array<i64: 32, 128>}]} {
    %c0 = arith.constant 0 : index
    %c0_0 = arith.constant 0 : index
    %0 = vector.load %arg1[%c0, %c0_0] : memref<32x128xf32, #tpu.memory_space<vmem>>, vector<32x128xf32>
    %1 = arith.truncf %0 : vector<32x128xf32> to vector<32x128xbf16>
    %c0_1 = arith.constant 0 : index
    %c0_2 = arith.constant 0 : index
    %2 = vector.load %arg4[%c0_1, %c0_2] : memref<128x128xbf16, #tpu.memory_space<vmem>>, vector<128x128xbf16>
    %cst = arith.constant dense<0.000000e+00> : vector<32x128xf32>
    %3 = tpu.matmul %1, %2, %cst {dimension_numbers = #tpu.dot_dimension_numbers<[1], [0], [0], [1], [0, 0, 1, 1], [], []>} : vector<32x128xbf16>, vector<128x128xbf16>, vector<32x128xf32> -> vector<32x128xf32>
    %c0_3 = arith.constant 0 : index
    %c0_4 = arith.constant 0 : index
    %4 = vector.load %arg5[%c0_3, %c0_4] : memref<1x128xf32, #tpu.memory_space<vmem>>, vector<1x128xf32>
    %5 = vector.broadcast %4 : vector<1x128xf32> to vector<32x128xf32>
    %6 = arith.addf %3, %5 : vector<32x128xf32>
    %cst_5 = arith.constant 0.000000e+00 : f32
    %7 = vector.broadcast %cst_5 : f32 to vector<32x128xf32>
    %8 = arith.maximumf %6, %7 : vector<32x128xf32>
    %9 = arith.truncf %8 : vector<32x128xf32> to vector<32x128xbf16>
    %c0_6 = arith.constant 0 : index
    %c0_7 = arith.constant 0 : index
    %10 = vector.load %arg6[%c0_6, %c0_7] : memref<128x128xbf16, #tpu.memory_space<vmem>>, vector<128x128xbf16>
    %cst_8 = arith.constant dense<0.000000e+00> : vector<32x128xf32>
    %11 = tpu.matmul %9, %10, %cst_8 {dimension_numbers = #tpu.dot_dimension_numbers<[1], [0], [0], [1], [0, 0, 1, 1], [], []>} : vector<32x128xbf16>, vector<128x128xbf16>, vector<32x128xf32> -> vector<32x128xf32>
    %c0_9 = arith.constant 0 : index
    %c0_10 = arith.constant 0 : index
    %12 = vector.load %arg7[%c0_9, %c0_10] : memref<1x128xf32, #tpu.memory_space<vmem>>, vector<1x128xf32>
    %13 = vector.broadcast %12 : vector<1x128xf32> to vector<32x128xf32>
    %14 = arith.addf %11, %13 : vector<32x128xf32>
    %cst_11 = arith.constant 0.000000e+00 : f32
    %15 = vector.broadcast %cst_11 : f32 to vector<32x128xf32>
    %16 = arith.maximumf %14, %15 : vector<32x128xf32>
    %17 = arith.truncf %16 : vector<32x128xf32> to vector<32x128xbf16>
    %c0_12 = arith.constant 0 : index
    %c0_13 = arith.constant 0 : index
    %18 = vector.load %arg8[%c0_12, %c0_13] : memref<128x128xbf16, #tpu.memory_space<vmem>>, vector<128x128xbf16>
    %cst_14 = arith.constant dense<0.000000e+00> : vector<32x128xf32>
    %19 = tpu.matmul %17, %18, %cst_14 {dimension_numbers = #tpu.dot_dimension_numbers<[1], [0], [0], [1], [0, 0, 1, 1], [], []>} : vector<32x128xbf16>, vector<128x128xbf16>, vector<32x128xf32> -> vector<32x128xf32>
    %c0_15 = arith.constant 0 : index
    %c0_16 = arith.constant 0 : index
    %20 = vector.load %arg9[%c0_15, %c0_16] : memref<1x128xf32, #tpu.memory_space<vmem>>, vector<1x128xf32>
    %21 = vector.broadcast %20 : vector<1x128xf32> to vector<32x128xf32>
    %22 = arith.addf %19, %21 : vector<32x128xf32>
    %c0_17 = arith.constant 0 : index
    %c0_18 = arith.constant 0 : index
    %23 = vector.load %arg2[%c0_17, %c0_18] : memref<32x128xbf16, #tpu.memory_space<vmem>>, vector<32x128xbf16>
    %24 = arith.extf %23 : vector<32x128xbf16> to vector<32x128xf32>
    %25 = arith.addf %22, %24 : vector<32x128xf32>
    %26 = tpu.iota {dimensions = array<i32: 1>} : vector<32x128xi32>
    %c0_19 = arith.constant 0 : index
    %c0_20 = arith.constant 0 : index
    %27 = vector.load %arg3[%c0_19, %c0_20] : memref<32x128xf32, #tpu.memory_space<vmem>>, vector<32x128xf32>
    %28 = arith.addf %25, %27 : vector<32x128xf32>
    %29 = arith.sitofp %26 : vector<32x128xi32> to vector<32x128xf32>
    %cst_21 = arith.constant 9.99999997E-7 : f32
    %30 = vector.broadcast %cst_21 : f32 to vector<32x128xf32>
    %31 = arith.mulf %30, %29 : vector<32x128xf32>
    %32 = arith.subf %28, %31 : vector<32x128xf32>
    %cst_22 = arith.constant 0.000000e+00 : f32
    %33 = vector.broadcast %cst_22 : f32 to vector<32x128xf32>
    %cst_23 = arith.constant 0.000000e+00 : f32
    %34 = vector.broadcast %cst_23 : f32 to vector<32x128xf32>
    %c0_i32 = arith.constant 0 : i32
    %35 = vector.broadcast %c0_i32 : i32 to vector<32x128xi32>
    %36 = arith.cmpi sge, %26, %35 : vector<32x128xi32>
    %c3_i32 = arith.constant 3 : i32
    %37 = vector.broadcast %c3_i32 : i32 to vector<32x128xi32>
    %38 = arith.cmpi slt, %26, %37 : vector<32x128xi32>
    %39 = arith.andi %36, %38 : vector<32x128xi1>
    %cst_24 = arith.constant -1.000000e+09 : f32
    %40 = vector.broadcast %cst_24 : f32 to vector<32x128xf32>
    %41 = arith.select %39, %25, %40 : vector<32x128xi1>, vector<32x128xf32>
    %cst_25 = arith.constant dense<0xFF800000> : vector<32xf32>
    %42 = vector.multi_reduction <maximumf>, %41, %cst_25 [1] : vector<32x128xf32> to vector<32xf32>
    %43 = vector.shape_cast %42 : vector<32xf32> to vector<32x1xf32>
    %44 = vector.shape_cast %43 : vector<32x1xf32> to vector<32x1xf32>
    %45 = vector.broadcast %44 : vector<32x1xf32> to vector<32x128xf32>
    %46 = arith.select %39, %45, %33 : vector<32x128xi1>, vector<32x128xf32>
    %cst_26 = arith.constant -1.000000e+09 : f32
    %47 = vector.broadcast %cst_26 : f32 to vector<32x128xf32>
    %48 = arith.select %39, %32, %47 : vector<32x128xi1>, vector<32x128xf32>
    %cst_27 = arith.constant dense<0xFF800000> : vector<32xf32>
    %49 = vector.multi_reduction <maximumf>, %48, %cst_27 [1] : vector<32x128xf32> to vector<32xf32>
    %50 = vector.shape_cast %49 : vector<32xf32> to vector<32x1xf32>
    %51 = vector.shape_cast %50 : vector<32x1xf32> to vector<32x1xf32>
    %52 = vector.broadcast %51 : vector<32x1xf32> to vector<32x128xf32>
    %53 = arith.select %39, %52, %34 : vector<32x128xi1>, vector<32x128xf32>
    %c3_i32_28 = arith.constant 3 : i32
    %54 = vector.broadcast %c3_i32_28 : i32 to vector<32x128xi32>
    %55 = arith.cmpi sge, %26, %54 : vector<32x128xi32>
    %c8_i32 = arith.constant 8 : i32
    %56 = vector.broadcast %c8_i32 : i32 to vector<32x128xi32>
    %57 = arith.cmpi slt, %26, %56 : vector<32x128xi32>
    %58 = arith.andi %55, %57 : vector<32x128xi1>
    %cst_29 = arith.constant -1.000000e+09 : f32
    %59 = vector.broadcast %cst_29 : f32 to vector<32x128xf32>
    %60 = arith.select %58, %25, %59 : vector<32x128xi1>, vector<32x128xf32>
    %cst_30 = arith.constant dense<0xFF800000> : vector<32xf32>
    %61 = vector.multi_reduction <maximumf>, %60, %cst_30 [1] : vector<32x128xf32> to vector<32xf32>
    %62 = vector.shape_cast %61 : vector<32xf32> to vector<32x1xf32>
    %63 = vector.shape_cast %62 : vector<32x1xf32> to vector<32x1xf32>
    %64 = vector.broadcast %63 : vector<32x1xf32> to vector<32x128xf32>
    %65 = arith.select %58, %64, %46 : vector<32x128xi1>, vector<32x128xf32>
    %cst_31 = arith.constant -1.000000e+09 : f32
    %66 = vector.broadcast %cst_31 : f32 to vector<32x128xf32>
    %67 = arith.select %58, %32, %66 : vector<32x128xi1>, vector<32x128xf32>
    %cst_32 = arith.constant dense<0xFF800000> : vector<32xf32>
    %68 = vector.multi_reduction <maximumf>, %67, %cst_32 [1] : vector<32x128xf32> to vector<32xf32>
    %69 = vector.shape_cast %68 : vector<32xf32> to vector<32x1xf32>
    %70 = vector.shape_cast %69 : vector<32x1xf32> to vector<32x1xf32>
    %71 = vector.broadcast %70 : vector<32x1xf32> to vector<32x128xf32>
    %72 = arith.select %58, %71, %53 : vector<32x128xi1>, vector<32x128xf32>
    %c8_i32_33 = arith.constant 8 : i32
    %73 = vector.broadcast %c8_i32_33 : i32 to vector<32x128xi32>
    %74 = arith.cmpi sge, %26, %73 : vector<32x128xi32>
    %c12_i32 = arith.constant 12 : i32
    %75 = vector.broadcast %c12_i32 : i32 to vector<32x128xi32>
    %76 = arith.cmpi slt, %26, %75 : vector<32x128xi32>
    %77 = arith.andi %74, %76 : vector<32x128xi1>
    %cst_34 = arith.constant -1.000000e+09 : f32
    %78 = vector.broadcast %cst_34 : f32 to vector<32x128xf32>
    %79 = arith.select %77, %25, %78 : vector<32x128xi1>, vector<32x128xf32>
    %cst_35 = arith.constant dense<0xFF800000> : vector<32xf32>
    %80 = vector.multi_reduction <maximumf>, %79, %cst_35 [1] : vector<32x128xf32> to vector<32xf32>
    %81 = vector.shape_cast %80 : vector<32xf32> to vector<32x1xf32>
    %82 = vector.shape_cast %81 : vector<32x1xf32> to vector<32x1xf32>
    %83 = vector.broadcast %82 : vector<32x1xf32> to vector<32x128xf32>
    %84 = arith.select %77, %83, %65 : vector<32x128xi1>, vector<32x128xf32>
    %cst_36 = arith.constant -1.000000e+09 : f32
    %85 = vector.broadcast %cst_36 : f32 to vector<32x128xf32>
    %86 = arith.select %77, %32, %85 : vector<32x128xi1>, vector<32x128xf32>
    %cst_37 = arith.constant dense<0xFF800000> : vector<32xf32>
    %87 = vector.multi_reduction <maximumf>, %86, %cst_37 [1] : vector<32x128xf32> to vector<32xf32>
    %88 = vector.shape_cast %87 : vector<32xf32> to vector<32x1xf32>
    %89 = vector.shape_cast %88 : vector<32x1xf32> to vector<32x1xf32>
    %90 = vector.broadcast %89 : vector<32x1xf32> to vector<32x128xf32>
    %91 = arith.select %77, %90, %72 : vector<32x128xi1>, vector<32x128xf32>
    %92 = arith.subf %25, %84 : vector<32x128xf32>
    %93 = math.exp %92 : vector<32x128xf32>
    %c12_i32_38 = arith.constant 12 : i32
    %94 = vector.broadcast %c12_i32_38 : i32 to vector<32x128xi32>
    %95 = arith.cmpi slt, %26, %94 : vector<32x128xi32>
    %96 = arith.cmpf oge, %32, %91 : vector<32x128xf32>
    %97 = arith.andi %95, %96 : vector<32x128xi1>
    %98 = arith.extui %97 : vector<32x128xi1> to vector<32x128xi32>
    %99 = arith.sitofp %98 : vector<32x128xi32> to vector<32x128xf32>
    %c0_39 = arith.constant 0 : index
    %c0_40 = arith.constant 0 : index
    %100 = vector.load %arg10[%c0_39, %c0_40] : memref<128x128xf32, #tpu.memory_space<vmem>>, vector<128x128xf32>
    %cst_41 = arith.constant dense<0.000000e+00> : vector<32x128xf32>
    %101 = tpu.matmul %93, %100, %cst_41 {dimension_numbers = #tpu.dot_dimension_numbers<[1], [0], [0], [1], [0, 0, 1, 1], [], []>} : vector<32x128xf32>, vector<128x128xf32>, vector<32x128xf32> -> vector<32x128xf32>
    %102 = arith.mulf %93, %92 : vector<32x128xf32>
    %cst_42 = arith.constant dense<0.000000e+00> : vector<32x128xf32>
    %103 = tpu.matmul %102, %100, %cst_42 {dimension_numbers = #tpu.dot_dimension_numbers<[1], [0], [0], [1], [0, 0, 1, 1], [], []>} : vector<32x128xf32>, vector<128x128xf32>, vector<32x128xf32> -> vector<32x128xf32>
    %c0_43 = arith.constant 0 : index
    %c0_44 = arith.constant 0 : index
    %104 = vector.load %arg11[%c0_43, %c0_44] : memref<1x128xf32, #tpu.memory_space<vmem>>, vector<1x128xf32>
    %105 = vector.broadcast %104 : vector<1x128xf32> to vector<32x128xf32>
    %106 = arith.mulf %99, %105 : vector<32x128xf32>
    %cst_45 = arith.constant dense<0.000000e+00> : vector<32x128xf32>
    %107 = tpu.matmul %106, %100, %cst_45 {dimension_numbers = #tpu.dot_dimension_numbers<[1], [0], [0], [1], [0, 0, 1, 1], [], []>} : vector<32x128xf32>, vector<128x128xf32>, vector<32x128xf32> -> vector<32x128xf32>
    %cst_46 = arith.constant 1.000000e-30 : f32
    %108 = vector.broadcast %cst_46 : f32 to vector<32x128xf32>
    %109 = arith.maximumf %101, %108 : vector<32x128xf32>
    %110 = math.log %109 : vector<32x128xf32>
    %111 = tpu.iota {dimensions = array<i32: 1>} : vector<32x128xi32>
    %c3_i32_47 = arith.constant 3 : i32
    %112 = vector.broadcast %c3_i32_47 : i32 to vector<32x128xi32>
    %113 = arith.cmpi slt, %111, %112 : vector<32x128xi32>
    %cst_48 = arith.constant 0.000000e+00 : f32
    %114 = vector.broadcast %cst_48 : f32 to vector<32x128xf32>
    %115 = arith.select %113, %110, %114 : vector<32x128xi1>, vector<32x128xf32>
    %116 = arith.mulf %99, %92 : vector<32x128xf32>
    %cst_49 = arith.constant dense<0.000000e+00> : vector<32xf32>
    %117 = vector.multi_reduction <add>, %116, %cst_49 [1] : vector<32x128xf32> to vector<32xf32>
    %118 = vector.shape_cast %117 : vector<32xf32> to vector<32x1xf32>
    %cst_50 = arith.constant dense<0.000000e+00> : vector<32xf32>
    %119 = vector.multi_reduction <add>, %115, %cst_50 [1] : vector<32x128xf32> to vector<32xf32>
    %120 = vector.shape_cast %119 : vector<32xf32> to vector<32x1xf32>
    %121 = arith.divf %103, %109 : vector<32x128xf32>
    %cst_51 = arith.constant dense<0.000000e+00> : vector<32xf32>
    %122 = vector.multi_reduction <add>, %121, %cst_51 [1] : vector<32x128xf32> to vector<32xf32>
    %123 = vector.shape_cast %122 : vector<32xf32> to vector<32x1xf32>
    %124 = arith.subf %118, %120 : vector<32x1xf32>
    %125 = arith.subf %120, %123 : vector<32x1xf32>
    %c3_i32_52 = arith.constant 3 : i32
    %126 = vector.broadcast %c3_i32_52 : i32 to vector<32x128xi32>
    %127 = arith.cmpi eq, %111, %126 : vector<32x128xi32>
    %128 = vector.shape_cast %124 : vector<32x1xf32> to vector<32x1xf32>
    %129 = vector.broadcast %128 : vector<32x1xf32> to vector<32x128xf32>
    %130 = arith.select %127, %129, %107 : vector<32x128xi1>, vector<32x128xf32>
    %c4_i32 = arith.constant 4 : i32
    %131 = vector.broadcast %c4_i32 : i32 to vector<32x128xi32>
    %132 = arith.cmpi eq, %111, %131 : vector<32x128xi32>
    %133 = vector.shape_cast %125 : vector<32x1xf32> to vector<32x1xf32>
    %134 = vector.broadcast %133 : vector<32x1xf32> to vector<32x128xf32>
    %135 = arith.select %132, %134, %130 : vector<32x128xi1>, vector<32x128xf32>
    %c0_53 = arith.constant 0 : index
    %c0_54 = arith.constant 0 : index
    %136 = vector.load %arg12[%c0_53, %c0_54] : memref<32x128xf32, #tpu.memory_space<vmem>>, vector<32x128xf32>
    tpu.vector_store %arg12[%c0_53, %c0_54], %135 {strides = array<i32>} : memref<32x128xf32, #tpu.memory_space<vmem>>, vector<32x128xf32>,
    return
  }
  func.func @transform_0(%arg0: i32) -> (i32, i32) {
    %c0_i32 = arith.constant 0 : i32
    %c0_i32_0 = arith.constant 0 : i32
    return %arg0, %c0_i32 : i32, i32
  }
  func.func @transform_1(%arg0: i32) -> (i32, i32) {
    %c0_i32 = arith.constant 0 : i32
    %c0_i32_0 = arith.constant 0 : i32
    return %arg0, %c0_i32 : i32, i32
  }
  func.func @transform_2(%arg0: i32) -> (i32, i32) {
    %c0_i32 = arith.constant 0 : i32
    %c0_i32_0 = arith.constant 0 : i32
    return %arg0, %c0_i32 : i32, i32
  }
  func.func @transform_3(%arg0: i32) -> (i32, i32) {
    %c0_i32 = arith.constant 0 : i32
    %c0_i32_0 = arith.constant 0 : i32
    %c0_i32_1 = arith.constant 0 : i32
    return %c0_i32, %c0_i32_0 : i32, i32
  }
  func.func @transform_4(%arg0: i32) -> (i32, i32) {
    %c0_i32 = arith.constant 0 : i32
    %c0_i32_0 = arith.constant 0 : i32
    %c0_i32_1 = arith.constant 0 : i32
    return %c0_i32, %c0_i32_0 : i32, i32
  }
  func.func @transform_5(%arg0: i32) -> (i32, i32) {
    %c0_i32 = arith.constant 0 : i32
    %c0_i32_0 = arith.constant 0 : i32
    %c0_i32_1 = arith.constant 0 : i32
    return %c0_i32, %c0_i32_0 : i32, i32
  }
  func.func @transform_6(%arg0: i32) -> (i32, i32) {
    %c0_i32 = arith.constant 0 : i32
    %c0_i32_0 = arith.constant 0 : i32
    %c0_i32_1 = arith.constant 0 : i32
    return %c0_i32, %c0_i32_0 : i32, i32
  }
  func.func @transform_7(%arg0: i32) -> (i32, i32) {
    %c0_i32 = arith.constant 0 : i32
    %c0_i32_0 = arith.constant 0 : i32
    %c0_i32_1 = arith.constant 0 : i32
    return %c0_i32, %c0_i32_0 : i32, i32
  }
  func.func @transform_8(%arg0: i32) -> (i32, i32) {
    %c0_i32 = arith.constant 0 : i32
    %c0_i32_0 = arith.constant 0 : i32
    %c0_i32_1 = arith.constant 0 : i32
    return %c0_i32, %c0_i32_0 : i32, i32
  }
  func.func @transform_9(%arg0: i32) -> (i32, i32) {
    %c0_i32 = arith.constant 0 : i32
    %c0_i32_0 = arith.constant 0 : i32
    %c0_i32_1 = arith.constant 0 : i32
    return %c0_i32, %c0_i32_0 : i32, i32
  }
  func.func @transform_10(%arg0: i32) -> (i32, i32) {
    %c0_i32 = arith.constant 0 : i32
    %c0_i32_0 = arith.constant 0 : i32
    %c0_i32_1 = arith.constant 0 : i32
    return %c0_i32, %c0_i32_0 : i32, i32
  }
  func.func @transform_11(%arg0: i32) -> (i32, i32) {
    %c0_i32 = arith.constant 0 : i32
    %c0_i32_0 = arith.constant 0 : i32
    return %arg0, %c0_i32 : i32, i32
  }
}

</mosaic_0001>

<llo_original>
// kernel: tpu_custom_call.1
$region0: #{tpu_custom_call.1}
  #allocation0 [shape = 'u32[]', space=smem, size = 0x4, offset = 0x4, fixed_abs, tag = 'smem constant byte address 0x4 - core index']
  #allocation1 [shape = 'u32[72,128]{1,0:T(1,128)}', space=vmem, size = 0x9000, scoped, tag = 'internal scratch']
  %s0 = inlined_call_operand.hbm [shape: f32[32,128], index: 0, kind: input, shape index: {}]
  %s1 = inlined_call_operand.hbm [shape: bf16[32,128], index: 1, kind: input, shape index: {}]
  %s2 = inlined_call_operand.hbm [shape: f32[32,128], index: 2, kind: input, shape index: {}]
  %s3 = inlined_call_operand.hbm [shape: bf16[128,128], index: 3, kind: input, shape index: {}]
  %s4 = inlined_call_operand.vmem [shape: f32[1,128], index: 4, kind: input, shape index: {}]
  %s5 = inlined_call_operand.hbm [shape: bf16[128,128], index: 5, kind: input, shape index: {}]
  %s6 = inlined_call_operand.vmem [shape: f32[1,128], index: 6, kind: input, shape index: {}]
  %s7 = inlined_call_operand.hbm [shape: bf16[128,128], index: 7, kind: input, shape index: {}]
  %s8 = inlined_call_operand.vmem [shape: f32[1,128], index: 8, kind: input, shape index: {}]
  %s9 = inlined_call_operand.hbm [shape: f32[128,128], index: 9, kind: input, shape index: {}]
  %s10 = inlined_call_operand.vmem [shape: f32[1,128], index: 10, kind: input, shape index: {}]
  %s11 = inlined_call_operand.hbm [shape: f32[32,128], index: 11, kind: output, shape index: {}]
  %s12 = sld [smem:[#allocation0]]
  $region82: #{tpu_custom_call.1} parent=0
    _
  %s14 = ssub.s32 1, %s12
  %s15 = scalar_select 0, %s14, %s12
  $region1: #{tpu_custom_call.1} parent=0
    #allocation2 [shape = 'u8[16384]{0}', space=vmem, size = 0x4000, scoped, tag = 'input window, operand 0, single buffered']
    #allocation3 [shape = 's32[1]{0}', space=sflag, size = 0x4, scoped, tag = 'scoped memory for tpu_custom_call.1']
    #allocation4 [shape = 's32[1]{0}', space=sflag, size = 0x4, scoped, tag = 'scoped memory for tpu_custom_call.1']
    #allocation5 [shape = 'u8[8192]{0}', space=vmem, size = 0x2000, scoped, tag = 'input window, operand 1, single buffered']
    #allocation6 [shape = 's32[1]{0}', space=sflag, size = 0x4, scoped, tag = 'scoped memory for tpu_custom_call.1']
    #allocation7 [shape = 'u8[16384]{0}', space=vmem, size = 0x4000, scoped, tag = 'input window, operand 2, single buffered']
    #allocation8 [shape = 'u8[32768]{0}', space=vmem, size = 0x8000, scoped, tag = 'input window, operand 3, single buffered']
    #allocation9 [shape = 's32[1]{0}', space=sflag, size = 0x4, scoped, tag = 'scoped memory for tpu_custom_call.1']
    #allocation10 [shape = 'u8[32768]{0}', space=vmem, size = 0x8000, scoped, tag = 'input window, operand 5, single buffered']
    #allocation11 [shape = 'u8[32768]{0}', space=vmem, size = 0x8000, scoped, tag = 'input window, operand 7, single buffered']
    #allocation12 [shape = 's32[1]{0}', space=sflag, size = 0x4, scoped, tag = 'scoped memory for tpu_custom_call.1']
    #allocation13 [shape = 'u8[65536]{0}', space=vmem, size = 0x10000, scoped, tag = 'input window, operand 9, single buffered']
    #allocation14 [shape = 'u8[16384]{0}', space=vmem, size = 0x4000, scoped, tag = 'output window, operand 0, single buffered']
    %16 = vsyncpa [#allocation3], 0
    %17 = vsyncpa [#allocation6], 0
    %18 = vsyncpa [#allocation9], 0
    %19 = vsyncpa [#allocation12], 0
    %20 = vsyncpa [#allocation4], 0
    // Predicated region
    $region2: #{tpu_custom_call.1} parent=1 // pred_check
      _
    $region3: #{tpu_custom_call.1} parent=1 // pred_check_branch
      %22 = sbr.rel (0) target = $region5
    $region4: #{tpu_custom_call.1} parent=1 // pred_region
      %24 = vsyncadd [#allocation3], 0
      %s25 = sshll.u32 %s0, 4
      %s26 = int_to_ptr.hbm [resolvable:$true] %s25
      %s27 = sshll.u32 [#allocation2], 4
      %s28 = int_to_ptr.vmem [resolvable:$true] %s27
      %33 = dma.hbm_to_vmem [thread:$0]  %s26, 512, %s28, [#allocation3], 128, 128, 8
    $region5: #{tpu_custom_call.1} parent=1 // pred_fallthru
      _
    // Predicated region
    $region6: #{tpu_custom_call.1} parent=1 // pred_check
      _
    $region7: #{tpu_custom_call.1} parent=1 // pred_check_branch
      %35 = sbr.rel (0) target = $region9
    $region8: #{tpu_custom_call.1} parent=1 // pred_region
      %37 = vsyncadd [#allocation6], 0
      %s38 = sshll.u32 %s1, 4
      %s39 = int_to_ptr.hbm [resolvable:$true] %s38
      %s40 = sshll.u32 [#allocation5], 4
      %s41 = int_to_ptr.vmem [resolvable:$true] %s40
      %46 = dma.hbm_to_vmem [thread:$0]  %s39, 256, %s41, [#allocation6], 64, 64, 4
    $region9: #{tpu_custom_call.1} parent=1 // pred_fallthru
      _
    // Predicated region
    $region10: #{tpu_custom_call.1} parent=1 // pred_check
      _
    $region11: #{tpu_custom_call.1} parent=1 // pred_check_branch
      %48 = sbr.rel (0) target = $region13
    $region12: #{tpu_custom_call.1} parent=1 // pred_region
      %50 = vsyncadd [#allocation6], 0
      %s51 = sshll.u32 %s2, 4
      %s52 = int_to_ptr.hbm [resolvable:$true] %s51
      %s53 = sshll.u32 [#allocation7], 4
      %s54 = int_to_ptr.vmem [resolvable:$true] %s53
      %59 = dma.hbm_to_vmem [thread:$0]  %s52, 512, %s54, [#allocation6], 128, 128, 8
    $region13: #{tpu_custom_call.1} parent=1 // pred_fallthru
      _
    // Predicated region
    $region14: #{tpu_custom_call.1} parent=1 // pred_check
      _
    $region15: #{tpu_custom_call.1} parent=1 // pred_check_branch
      %61 = sbr.rel (0) target = $region17
    $region16: #{tpu_custom_call.1} parent=1 // pred_region
      %63 = vsyncadd [#allocation9], 0
      %s64 = sshll.u32 %s3, 4
      %s65 = int_to_ptr.hbm [resolvable:$true] %s64
      %s66 = sshll.u32 [#allocation8], 4
      %s67 = int_to_ptr.vmem [resolvable:$true] %s66
      %72 = dma.hbm_to_vmem [thread:$0]  %s65, 1024, %s67, [#allocation9], 64, 64, 4
    $region17: #{tpu_custom_call.1} parent=1 // pred_fallthru
      _
    // Predicated region
    $region18: #{tpu_custom_call.1} parent=1 // pred_check
      _
    $region19: #{tpu_custom_call.1} parent=1 // pred_check_branch
      %74 = sbr.rel (0) target = $region21
    $region20: #{tpu_custom_call.1} parent=1 // pred_region
      _
    $region21: #{tpu_custom_call.1} parent=1 // pred_fallthru
      _
    // Predicated region
    $region22: #{tpu_custom_call.1} parent=1 // pred_check
      _
    $region23: #{tpu_custom_call.1} parent=1 // pred_check_branch
      %76 = sbr.rel (0) target = $region25
    $region24: #{tpu_custom_call.1} parent=1 // pred_region
      %78 = vsyncadd [#allocation9], 0
      %s79 = sshll.u32 %s5, 4
      %s80 = int_to_ptr.hbm [resolvable:$true] %s79
      %s81 = sshll.u32 [#allocation10], 4
      %s82 = int_to_ptr.vmem [resolvable:$true] %s81
      %87 = dma.hbm_to_vmem [thread:$0]  %s80, 1024, %s82, [#allocation9], 64, 64, 4
    $region25: #{tpu_custom_call.1} parent=1 // pred_fallthru
      _
    // Predicated region
    $region26: #{tpu_custom_call.1} parent=1 // pred_check
      _
    $region27: #{tpu_custom_call.1} parent=1 // pred_check_branch
      %89 = sbr.rel (0) target = $region29
    $region28: #{tpu_custom_call.1} parent=1 // pred_region
      _
    $region29: #{tpu_custom_call.1} parent=1 // pred_fallthru
      _
    // Predicated region
    $region30: #{tpu_custom_call.1} parent=1 // pred_check
      _
    $region31: #{tpu_custom_call.1} parent=1 // pred_check_branch
      %91 = sbr.rel (0) target = $region33
    $region32: #{tpu_custom_call.1} parent=1 // pred_region
      %93 = vsyncadd [#allocation12], 0
      %s94 = sshll.u32 %s7, 4
      %s95 = int_to_ptr.hbm [resolvable:$true] %s94
      %s96 = sshll.u32 [#allocation11], 4
      %s97 = int_to_ptr.vmem [resolvable:$true] %s96
      %102 = dma.hbm_to_vmem [thread:$0]  %s95, 1024, %s97, [#allocation12], 64, 64, 4
    $region33: #{tpu_custom_call.1} parent=1 // pred_fallthru
      _
    // Predicated region
    $region34: #{tpu_custom_call.1} parent=1 // pred_check
      _
    $region35: #{tpu_custom_call.1} parent=1 // pred_check_branch
      %104 = sbr.rel (0) target = $region37
    $region36: #{tpu_custom_call.1} parent=1 // pred_region
      _
    $region37: #{tpu_custom_call.1} parent=1 // pred_fallthru
      _
    // Predicated region
    $region38: #{tpu_custom_call.1} parent=1 // pred_check
      _
    $region39: #{tpu_custom_call.1} parent=1 // pred_check_branch
      %106 = sbr.rel (0) target = $region41
    $region40: #{tpu_custom_call.1} parent=1 // pred_region
      %108 = vsyncadd [#allocation12], 0
      %s109 = sshll.u32 %s9, 4
      %s110 = int_to_ptr.hbm [resolvable:$true] %s109
      %s111 = sshll.u32 [#allocation13], 4
      %s112 = int_to_ptr.vmem [resolvable:$true] %s111
      %117 = dma.hbm_to_vmem [thread:$0]  %s110, 2048, %s112, [#allocation12], 128, 128, 8
    $region41: #{tpu_custom_call.1} parent=1 // pred_fallthru
      _
    // Predicated region
    $region42: #{tpu_custom_call.1} parent=1 // pred_check
      _
    $region43: #{tpu_custom_call.1} parent=1 // pred_check_branch
      %119 = sbr.rel (0) target = $region45
    $region44: #{tpu_custom_call.1} parent=1 // pred_region
      _
    $region45: #{tpu_custom_call.1} parent=1 // pred_fallthru
      _
    // Predicated region
    $region46: #{tpu_custom_call.1} parent=1 // pred_check
      _
    $region47: #{tpu_custom_call.1} parent=1 // pred_check_branch
      %121 = sbr.rel (0) target = $region49
    $region48: #{tpu_custom_call.1} parent=1 // pred_region
      %123 = dma.done [#allocation3], 512
    $region49: #{tpu_custom_call.1} parent=1 // pred_fallthru
      _
    // Predicated region
    $region50: #{tpu_custom_call.1} parent=1 // pred_check
      _
    $region51: #{tpu_custom_call.1} parent=1 // pred_check_branch
      %125 = sbr.rel (0) target = $region53
    $region52: #{tpu_custom_call.1} parent=1 // pred_region
      %127 = dma.done [#allocation6], 256
    $region53: #{tpu_custom_call.1} parent=1 // pred_fallthru
      _
    // Predicated region
    $region54: #{tpu_custom_call.1} parent=1 // pred_check
      _
    $region55: #{tpu_custom_call.1} parent=1 // pred_check_branch
      %129 = sbr.rel (0) target = $region57
    $region56: #{tpu_custom_call.1} parent=1 // pred_region
      %131 = dma.done [#allocation6], 512
    $region57: #{tpu_custom_call.1} parent=1 // pred_fallthru
      _
    // Predicated region
    $region58: #{tpu_custom_call.1} parent=1 // pred_check
      _
    $region59: #{tpu_custom_call.1} parent=1 // pred_check_branch
      %133 = sbr.rel (0) target = $region61
    $region60: #{tpu_custom_call.1} parent=1 // pred_region
      %135 = dma.done [#allocation9], 1024
    $region61: #{tpu_custom_call.1} parent=1 // pred_fallthru
      _
    // Predicated region
    $region62: #{tpu_custom_call.1} parent=1 // pred_check
      _
    $region63: #{tpu_custom_call.1} parent=1 // pred_check_branch
      %137 = sbr.rel (0) target = $region65
    $region64: #{tpu_custom_call.1} parent=1 // pred_region
      %139 = dma.done [#allocation9], 1024
    $region65: #{tpu_custom_call.1} parent=1 // pred_fallthru
      _
    // Predicated region
    $region66: #{tpu_custom_call.1} parent=1 // pred_check
      _
    $region67: #{tpu_custom_call.1} parent=1 // pred_check_branch
      %141 = sbr.rel (0) target = $region69
    $region68: #{tpu_custom_call.1} parent=1 // pred_region
      %143 = dma.done [#allocation12], 1024
    $region69: #{tpu_custom_call.1} parent=1 // pred_fallthru
      _
    // Predicated region
    $region70: #{tpu_custom_call.1} parent=1 // pred_check
      _
    $region71: #{tpu_custom_call.1} parent=1 // pred_check_branch
      %145 = sbr.rel (0) target = $region73
    $region72: #{tpu_custom_call.1} parent=1 // pred_region
      %147 = dma.done [#allocation12], 2048
    $region73: #{tpu_custom_call.1} parent=1 // pred_fallthru
      _
    %v148 = vld [vmem:[#allocation2] sm:$0xff]
    %v149 = vld [vmem:[#allocation2 + $0x8] sm:$0xff]
    %v150 = vld [vmem:[#allocation2 + $0x10] sm:$0xff]
    %v151 = vld [vmem:[#allocation2 + $0x18] sm:$0xff]
    %v152 = vpack.c.bf16 %v149, %v148
    %v153 = vpack.c.bf16 %v151, %v150
    %v154 = vld [vmem:[#allocation8] sm:$0xf]
    %v155 = vld [vmem:[#allocation8 + $0x4] sm:$0xf]
    %v156 = vld [vmem:[#allocation8 + $0x8] sm:$0xf]
    %v157 = vld [vmem:[#allocation8 + $0xc] sm:$0xf]
    %v158 = vld [vmem:[#allocation8 + $0x10] sm:$0xf]
    %v159 = vld [vmem:[#allocation8 + $0x14] sm:$0xf]
    %v160 = vld [vmem:[#allocation8 + $0x18] sm:$0xf]
    %v161 = vld [vmem:[#allocation8 + $0x1c] sm:$0xf]
    %v162 = vld [vmem:[#allocation8 + $0x20] sm:$0xf]
    %v163 = vld [vmem:[#allocation8 + $0x24] sm:$0xf]
    %v164 = vld [vmem:[#allocation8 + $0x28] sm:$0xf]
    %v165 = vld [vmem:[#allocation8 + $0x2c] sm:$0xf]
    %v166 = vld [vmem:[#allocation8 + $0x30] sm:$0xf]
    %v167 = vld [vmem:[#allocation8 + $0x34] sm:$0xf]
    %v168 = vld [vmem:[#allocation8 + $0x38] sm:$0xf]
    %v169 = vld [vmem:[#allocation8 + $0x3c] sm:$0xf]
    %v170 = vld [vmem:[%s4] sm:$0x1]
    %v172 = vperm.slane %v170, 0
    %v190 = vunpack.c.l.b16 %v154
    %v191 = vunpack.c.l.b16 %v155
    %v192 = vunpack.c.l.b16 %v156
    %v193 = vunpack.c.l.b16 %v157
    %v194 = vunpack.c.l.b16 %v158
    %v195 = vunpack.c.l.b16 %v159
    %v196 = vunpack.c.l.b16 %v160
    %v197 = vunpack.c.l.b16 %v161
    %v198 = vunpack.c.l.b16 %v162
    %v199 = vunpack.c.l.b16 %v163
    %v200 = vunpack.c.l.b16 %v164
    %v201 = vunpack.c.l.b16 %v165
    %v202 = vunpack.c.l.b16 %v166
    %v203 = vunpack.c.l.b16 %v167
    %v204 = vunpack.c.l.b16 %v168
    %v205 = vunpack.c.l.b16 %v169
    %v206 = vpack.c.b16 %v191, %v190
    %v207 = vpack.c.b16 %v193, %v192
    %v208 = vpack.c.b16 %v195, %v194
    %v209 = vpack.c.b16 %v197, %v196
    %v210 = vpack.c.b16 %v199, %v198
    %v211 = vpack.c.b16 %v201, %v200
    %v212 = vpack.c.b16 %v203, %v202
    %v213 = vpack.c.b16 %v205, %v204
    %222 = vmatpush.bf16.msra.mxu0 %v213
    %223 = vmatpush.bf16.msra.mxu0 %v212
    %224 = vmatpush.bf16.msra.mxu0 %v211
    %225 = vmatpush.bf16.msra.mxu0 %v210
    %226 = vmatpush.bf16.msra.mxu0 %v209
    %227 = vmatpush.bf16.msra.mxu0 %v208
    %228 = vmatpush.bf16.msra.mxu0 %v207
    %229 = vmatpush.bf16.msra.mxu0 %v206
    %230 = vmatmul.bf16.gmra.mxu0 %v152
    %v231 = vpop.f32.mrf.mxu0
    %v232 = vadd.f32 %v172, %v231
    %v233 = vpop.f32.mrf.mxu0
    %v234 = vadd.f32 %v172, %v233
    %235 = vmatmul.bf16.gmra.mxu0 %v153
    %v236 = vpop.f32.mrf.mxu0
    %v237 = vadd.f32 %v172, %v236
    %v238 = vpop.f32.mrf.mxu0
    %v239 = vadd.f32 %v172, %v238
    %240 = vdwg.mxu0
    %v241 = vmax.f32 %v232, 0.0
    %v242 = vmax.f32 %v234, 0.0
    %v243 = vmax.f32 %v237, 0.0
    %v244 = vmax.f32 %v239, 0.0
    %v245 = vpack.c.bf16 %v242, %v241
    %v246 = vpack.c.bf16 %v244, %v243
    %v247 = vld [vmem:[#allocation10] sm:$0xf]
    %v248 = vld [vmem:[#allocation10 + $0x4] sm:$0xf]
    %v249 = vld [vmem:[#allocation10 + $0x8] sm:$0xf]
    %v250 = vld [vmem:[#allocation10 + $0xc] sm:$0xf]
    %v251 = vld [vmem:[#allocation10 + $0x10] sm:$0xf]
    %v252 = vld [vmem:[#allocation10 + $0x14] sm:$0xf]
    %v253 = vld [vmem:[#allocation10 + $0x18] sm:$0xf]
    %v254 = vld [vmem:[#allocation10 + $0x1c] sm:$0xf]
    %v255 = vld [vmem:[#allocation10 + $0x20] sm:$0xf]
    %v256 = vld [vmem:[#allocation10 + $0x24] sm:$0xf]
    %v257 = vld [vmem:[#allocation10 + $0x28] sm:$0xf]
    %v258 = vld [vmem:[#allocation10 + $0x2c] sm:$0xf]
    %v259 = vld [vmem:[#allocation10 + $0x30] sm:$0xf]
    %v260 = vld [vmem:[#allocation10 + $0x34] sm:$0xf]
    %v261 = vld [vmem:[#allocation10 + $0x38] sm:$0xf]
    %v262 = vld [vmem:[#allocation10 + $0x3c] sm:$0xf]
    %v263 = vld [vmem:[%s6] sm:$0x1]
    %v265 = vperm.slane %v263, 0
    %v283 = vunpack.c.l.b16 %v247
    %v284 = vunpack.c.l.b16 %v248
    %v285 = vunpack.c.l.b16 %v249
    %v286 = vunpack.c.l.b16 %v250
    %v287 = vunpack.c.l.b16 %v251
    %v288 = vunpack.c.l.b16 %v252
    %v289 = vunpack.c.l.b16 %v253
    %v290 = vunpack.c.l.b16 %v254
    %v291 = vunpack.c.l.b16 %v255
    %v292 = vunpack.c.l.b16 %v256
    %v293 = vunpack.c.l.b16 %v257
    %v294 = vunpack.c.l.b16 %v258
    %v295 = vunpack.c.l.b16 %v259
    %v296 = vunpack.c.l.b16 %v260
    %v297 = vunpack.c.l.b16 %v261
    %v298 = vunpack.c.l.b16 %v262
    %v299 = vpack.c.b16 %v284, %v283
    %v300 = vpack.c.b16 %v286, %v285
    %v301 = vpack.c.b16 %v288, %v287
    %v302 = vpack.c.b16 %v290, %v289
    %v303 = vpack.c.b16 %v292, %v291
    %v304 = vpack.c.b16 %v294, %v293
    %v305 = vpack.c.b16 %v296, %v295
    %v306 = vpack.c.b16 %v298, %v297
    %315 = vmatpush.bf16.msra.mxu0 %v306
    %316 = vmatpush.bf16.msra.mxu0 %v305
    %317 = vmatpush.bf16.msra.mxu0 %v304
    %318 = vmatpush.bf16.msra.mxu0 %v303
    %319 = vmatpush.bf16.msra.mxu0 %v302
    %320 = vmatpush.bf16.msra.mxu0 %v301
    %321 = vmatpush.bf16.msra.mxu0 %v300
    %322 = vmatpush.bf16.msra.mxu0 %v299
    %323 = vmatmul.bf16.gmra.mxu0 %v245
    %v324 = vpop.f32.mrf.mxu0
    %v325 = vadd.f32 %v265, %v324
    %v326 = vpop.f32.mrf.mxu0
    %v327 = vadd.f32 %v265, %v326
    %328 = vmatmul.bf16.gmra.mxu0 %v246
    %v329 = vpop.f32.mrf.mxu0
    %v330 = vadd.f32 %v265, %v329
    %v331 = vpop.f32.mrf.mxu0
    %v332 = vadd.f32 %v265, %v331
    %333 = vdwg.mxu0
    %v334 = vmax.f32 %v325, 0.0
    %v335 = vmax.f32 %v327, 0.0
    %v336 = vmax.f32 %v330, 0.0
    %v337 = vmax.f32 %v332, 0.0
    %v338 = vpack.c.bf16 %v335, %v334
    %v339 = vpack.c.bf16 %v337, %v336
    %v340 = vld [vmem:[#allocation11] sm:$0xf]
    %v341 = vld [vmem:[#allocation11 + $0x4] sm:$0xf]
    %v342 = vld [vmem:[#allocation11 + $0x8] sm:$0xf]
    %v343 = vld [vmem:[#allocation11 + $0xc] sm:$0xf]
    %v344 = vld [vmem:[#allocation11 + $0x10] sm:$0xf]
    %v345 = vld [vmem:[#allocation11 + $0x14] sm:$0xf]
    %v346 = vld [vmem:[#allocation11 + $0x18] sm:$0xf]
    %v347 = vld [vmem:[#allocation11 + $0x1c] sm:$0xf]
    %v348 = vld [vmem:[#allocation11 + $0x20] sm:$0xf]
    %v349 = vld [vmem:[#allocation11 + $0x24] sm:$0xf]
    %v350 = vld [vmem:[#allocation11 + $0x28] sm:$0xf]
    %v351 = vld [vmem:[#allocation11 + $0x2c] sm:$0xf]
    %v352 = vld [vmem:[#allocation11 + $0x30] sm:$0xf]
    %v353 = vld [vmem:[#allocation11 + $0x34] sm:$0xf]
    %v354 = vld [vmem:[#allocation11 + $0x38] sm:$0xf]
    %v355 = vld [vmem:[#allocation11 + $0x3c] sm:$0xf]
    %v356 = vld [vmem:[%s8] sm:$0x1]
    %v358 = vperm.slane %v356, 0
    %v376 = vunpack.c.l.b16 %v340
    %v377 = vunpack.c.l.b16 %v341
    %v378 = vunpack.c.l.b16 %v342
    %v379 = vunpack.c.l.b16 %v343
    %v380 = vunpack.c.l.b16 %v344
    %v381 = vunpack.c.l.b16 %v345
    %v382 = vunpack.c.l.b16 %v346
    %v383 = vunpack.c.l.b16 %v347
    %v384 = vunpack.c.l.b16 %v348
    %v385 = vunpack.c.l.b16 %v349
    %v386 = vunpack.c.l.b16 %v350
    %v387 = vunpack.c.l.b16 %v351
    %v388 = vunpack.c.l.b16 %v352
    %v389 = vunpack.c.l.b16 %v353
    %v390 = vunpack.c.l.b16 %v354
    %v391 = vunpack.c.l.b16 %v355
    %v392 = vpack.c.b16 %v377, %v376
    %v393 = vpack.c.b16 %v379, %v378
    %v394 = vpack.c.b16 %v381, %v380
    %v395 = vpack.c.b16 %v383, %v382
    %v396 = vpack.c.b16 %v385, %v384
    %v397 = vpack.c.b16 %v387, %v386
    %v398 = vpack.c.b16 %v389, %v388
    %v399 = vpack.c.b16 %v391, %v390
    %408 = vmatpush.bf16.msra.mxu0 %v399
    %409 = vmatpush.bf16.msra.mxu0 %v398
    %410 = vmatpush.bf16.msra.mxu0 %v397
    %411 = vmatpush.bf16.msra.mxu0 %v396
    %412 = vmatpush.bf16.msra.mxu0 %v395
    %413 = vmatpush.bf16.msra.mxu0 %v394
    %414 = vmatpush.bf16.msra.mxu0 %v393
    %415 = vmatpush.bf16.msra.mxu0 %v392
    %416 = vmatmul.bf16.gmra.mxu0 %v338
    %v417 = vpop.f32.mrf.mxu0
    %v418 = vadd.f32 %v358, %v417
    %v419 = vpop.f32.mrf.mxu0
    %v420 = vadd.f32 %v358, %v419
    %421 = vmatmul.bf16.gmra.mxu0 %v339
    %v422 = vpop.f32.mrf.mxu0
    %v423 = vadd.f32 %v358, %v422
    %v424 = vpop.f32.mrf.mxu0
    %v425 = vadd.f32 %v358, %v424
    %426 = vdwg.mxu0
    %v427 = vld [vmem:[#allocation5] sm:$0xf]
    %v428 = vld [vmem:[#allocation5 + $0x4] sm:$0xf]
    %v429 = vld [vmem:[#allocation5 + $0x8] sm:$0xf]
    %v430 = vld [vmem:[#allocation5 + $0xc] sm:$0xf]
    %v431 = vunpack.c.l.bf16 %v427
    %v432 = vunpack.c.l.bf16 %v428
    %v433 = vunpack.c.l.bf16 %v429
    %v434 = vunpack.c.l.bf16 %v430
    %v435 = vadd.f32 %v418, %v431
    %v436 = vadd.f32 %v420, %v432
    %v437 = vadd.f32 %v423, %v433
    %v438 = vadd.f32 %v425, %v434
    %v439 = vlaneseq
    %v440 = vand.u32 %v439, 127
    %v441 = vld [vmem:[#allocation7] sm:$0xff]
    %v442 = vld [vmem:[#allocation7 + $0x8] sm:$0xff]
    %v443 = vld [vmem:[#allocation7 + $0x10] sm:$0xff]
    %v444 = vld [vmem:[#allocation7 + $0x18] sm:$0xff]
    %v445 = vadd.f32 %v435, %v441
    %v446 = vadd.f32 %v436, %v442
    %v447 = vadd.f32 %v437, %v443
    %v448 = vadd.f32 %v438, %v444
    %v449 = vcvt.s32.f32 %v440
    %v450 = vmul.f32 %v449, 1e-06
    %v451 = vsub.f32 %v445, %v450
    %v452 = vsub.f32 %v446, %v450
    %v453 = vsub.f32 %v447, %v450
    %v454 = vsub.f32 %v448, %v450
    %vm455 = vcmp.ge.s32.totalorder %v440, 0
    %vm456 = vcmp.lt.s32.totalorder %v440, 3
    %vm457 = vmand %vm455, %vm456
    %v458 = vsel %vm457, %v435, -1e+09
    %v459 = vsel %vm457, %v436, -1e+09
    %v460 = vsel %vm457, %v437, -1e+09
    %v461 = vsel %vm457, %v438, -1e+09
    %462 = vmax.xlane.f32.xlu0 %v458
    %v463 = vpop.xlane.xlu0 %462
    %464 = vmax.xlane.f32.xlu0 %v459
    %v465 = vpop.xlane.xlu0 %464
    %466 = vmax.xlane.f32.xlu0 %v460
    %v467 = vpop.xlane.xlu0 %466
    %468 = vmax.xlane.f32.xlu0 %v461
    %v469 = vpop.xlane.xlu0 %468
    %v470 = vsel %vm457, %v463, 0.0
    %v471 = vsel %vm457, %v465, 0.0
    %v472 = vsel %vm457, %v467, 0.0
    %v473 = vsel %vm457, %v469, 0.0
    %v474 = vsel %vm457, %v451, -1e+09
    %v475 = vsel %vm457, %v452, -1e+09
    %v476 = vsel %vm457, %v453, -1e+09
    %v477 = vsel %vm457, %v454, -1e+09
    %478 = vmax.xlane.f32.xlu0 %v474
    %v479 = vpop.xlane.xlu0 %478
    %480 = vmax.xlane.f32.xlu0 %v475
    %v481 = vpop.xlane.xlu0 %480
    %482 = vmax.xlane.f32.xlu0 %v476
    %v483 = vpop.xlane.xlu0 %482
    %484 = vmax.xlane.f32.xlu0 %v477
    %v485 = vpop.xlane.xlu0 %484
    %v486 = vsel %vm457, %v479, 0.0
    %v487 = vsel %vm457, %v481, 0.0
    %v488 = vsel %vm457, %v483, 0.0
    %v489 = vsel %vm457, %v485, 0.0
    %vm490 = vcmp.ge.s32.totalorder %v440, 3
    %vm491 = vcmp.lt.s32.totalorder %v440, 8
    %vm492 = vmand %vm490, %vm491
    %v493 = vsel %vm492, %v435, -1e+09
    %v494 = vsel %vm492, %v436, -1e+09
    %v495 = vsel %vm492, %v437, -1e+09
    %v496 = vsel %vm492, %v438, -1e+09
    %497 = vmax.xlane.f32.xlu0 %v493
    %v498 = vpop.xlane.xlu0 %497
    %499 = vmax.xlane.f32.xlu0 %v494
    %v500 = vpop.xlane.xlu0 %499
    %501 = vmax.xlane.f32.xlu0 %v495
    %v502 = vpop.xlane.xlu0 %501
    %503 = vmax.xlane.f32.xlu0 %v496
    %v504 = vpop.xlane.xlu0 %503
    %v505 = vsel %vm492, %v498, %v470
    %v506 = vsel %vm492, %v500, %v471
    %v507 = vsel %vm492, %v502, %v472
    %v508 = vsel %vm492, %v504, %v473
    %v509 = vsel %vm492, %v451, -1e+09
    %v510 = vsel %vm492, %v452, -1e+09
    %v511 = vsel %vm492, %v453, -1e+09
    %v512 = vsel %vm492, %v454, -1e+09
    %513 = vmax.xlane.f32.xlu0 %v509
    %v514 = vpop.xlane.xlu0 %513
    %515 = vmax.xlane.f32.xlu0 %v510
    %v516 = vpop.xlane.xlu0 %515
    %517 = vmax.xlane.f32.xlu0 %v511
    %v518 = vpop.xlane.xlu0 %517
    %519 = vmax.xlane.f32.xlu0 %v512
    %v520 = vpop.xlane.xlu0 %519
    %v521 = vsel %vm492, %v514, %v486
    %v522 = vsel %vm492, %v516, %v487
    %v523 = vsel %vm492, %v518, %v488
    %v524 = vsel %vm492, %v520, %v489
    %vm525 = vcmp.ge.s32.totalorder %v440, 8
    %vm526 = vcmp.lt.s32.totalorder %v440, 12
    %vm527 = vmand %vm525, %vm526
    %v528 = vsel %vm527, %v435, -1e+09
    %v529 = vsel %vm527, %v436, -1e+09
    %v530 = vsel %vm527, %v437, -1e+09
    %v531 = vsel %vm527, %v438, -1e+09
    %532 = vmax.xlane.f32.xlu0 %v528
    %v533 = vpop.xlane.xlu0 %532
    %534 = vmax.xlane.f32.xlu0 %v529
    %v535 = vpop.xlane.xlu0 %534
    %536 = vmax.xlane.f32.xlu0 %v530
    %v537 = vpop.xlane.xlu0 %536
    %538 = vmax.xlane.f32.xlu0 %v531
    %v539 = vpop.xlane.xlu0 %538
    %v540 = vsel %vm527, %v533, %v505
    %v541 = vsel %vm527, %v535, %v506
    %v542 = vsel %vm527, %v537, %v507
    %v543 = vsel %vm527, %v539, %v508
    %v544 = vsel %vm527, %v451, -1e+09
    %v545 = vsel %vm527, %v452, -1e+09
    %v546 = vsel %vm527, %v453, -1e+09
    %v547 = vsel %vm527, %v454, -1e+09
    %548 = vmax.xlane.f32.xlu0 %v544
    %v549 = vpop.xlane.xlu0 %548
    %550 = vmax.xlane.f32.xlu0 %v545
    %v551 = vpop.xlane.xlu0 %550
    %552 = vmax.xlane.f32.xlu0 %v546
    %v553 = vpop.xlane.xlu0 %552
    %554 = vmax.xlane.f32.xlu0 %v547
    %v555 = vpop.xlane.xlu0 %554
    %v556 = vsel %vm527, %v549, %v521
    %v557 = vsel %vm527, %v551, %v522
    %v558 = vsel %vm527, %v553, %v523
    %v559 = vsel %vm527, %v555, %v524
    %v560 = vsub.f32 %v435, %v540
    %v561 = vsub.f32 %v436, %v541
    %v562 = vsub.f32 %v437, %v542
    %v563 = vsub.f32 %v438, %v543
    %v564 = vmul.f32 %v560, 1.442695
    %v565 = vpow.pop %v564
    %v566 = vmul.f32 %v561, 1.442695
    %v567 = vpow.pop %v566
    %v568 = vmul.f32 %v562, 1.442695
    %v569 = vpow.pop %v568
    %v570 = vmul.f32 %v563, 1.442695
    %v571 = vpow.pop %v570
    %vm572 = vcmp.ge.f32.partialorder %v451, %v556
    %vm573 = vcmp.ge.f32.partialorder %v452, %v557
    %vm574 = vcmp.ge.f32.partialorder %v453, %v558
    %vm575 = vcmp.ge.f32.partialorder %v454, %v559
    %vm576 = vmand %vm526, %vm572
    %vm577 = vmand %vm526, %vm573
    %vm578 = vmand %vm526, %vm574
    %vm579 = vmand %vm526, %vm575
    %v580 = vsel %vm576, 1, 0
    %v581 = vsel %vm577, 1, 0
    %v582 = vsel %vm578, 1, 0
    %v583 = vsel %vm579, 1, 0
    %v584 = vcvt.s32.f32 %v580
    %v585 = vcvt.s32.f32 %v581
    %v586 = vcvt.s32.f32 %v582
    %v587 = vcvt.s32.f32 %v583
    %v588 = vld [vmem:[#allocation13] sm:$0xff]
    %v589 = vld [vmem:[#allocation13 + $0x8] sm:$0xff]
    %v590 = vld [vmem:[#allocation13 + $0x10] sm:$0xff]
    %v591 = vld [vmem:[#allocation13 + $0x18] sm:$0xff]
    %v592 = vld [vmem:[#allocation13 + $0x20] sm:$0xff]
    %v593 = vld [vmem:[#allocation13 + $0x28] sm:$0xff]
    %v594 = vld [vmem:[#allocation13 + $0x30] sm:$0xff]
    %v595 = vld [vmem:[#allocation13 + $0x38] sm:$0xff]
    %v596 = vld [vmem:[#allocation13 + $0x40] sm:$0xff]
    %v597 = vld [vmem:[#allocation13 + $0x48] sm:$0xff]
    %v598 = vld [vmem:[#allocation13 + $0x50] sm:$0xff]
    %v599 = vld [vmem:[#allocation13 + $0x58] sm:$0xff]
    %v600 = vld [vmem:[#allocation13 + $0x60] sm:$0xff]
    %v601 = vld [vmem:[#allocation13 + $0x68] sm:$0xff]
    %v602 = vld [vmem:[#allocation13 + $0x70] sm:$0xff]
    %v603 = vld [vmem:[#allocation13 + $0x78] sm:$0xff]
    %604 = vmatpush.msra.mxu0 %v603
    %605 = vmatpush.msra.mxu0 %v602
    %606 = vmatpush.msra.mxu0 %v601
    %607 = vmatpush.msra.mxu0 %v600
    %608 = vmatpush.msra.mxu0 %v599
    %609 = vmatpush.msra.mxu0 %v598
    %610 = vmatpush.msra.mxu0 %v597
    %611 = vmatpush.msra.mxu0 %v596
    %612 = vmatpush.msra.mxu0 %v595
    %613 = vmatpush.msra.mxu0 %v594
    %614 = vmatpush.msra.mxu0 %v593
    %615 = vmatpush.msra.mxu0 %v592
    %616 = vmatpush.msra.mxu0 %v591
    %617 = vmatpush.msra.mxu0 %v590
    %618 = vmatpush.msra.mxu0 %v589
    %619 = vmatpush.msra.mxu0 %v588
    %620 = vmatmul.f32.gmra.mxu0 %v565
    %v621 = vpop.f32.mrf.mxu0
    %v622 = vadd.f32 0.0, %v621
    %623 = vmatmul.f32.gmra.mxu0 %v567
    %v624 = vpop.f32.mrf.mxu0
    %v625 = vadd.f32 0.0, %v624
    %626 = vmatmul.f32.gmra.mxu0 %v569
    %v627 = vpop.f32.mrf.mxu0
    %v628 = vadd.f32 0.0, %v627
    %629 = vmatmul.f32.gmra.mxu0 %v571
    %v630 = vpop.f32.mrf.mxu0
    %v631 = vadd.f32 0.0, %v630
    %632 = vdwg.mxu0
    %v633 = vmul.f32 %v565, %v560
    %v634 = vmul.f32 %v567, %v561
    %v635 = vmul.f32 %v569, %v562
    %v636 = vmul.f32 %v571, %v563
    %637 = vmatpush.msra.mxu0 %v603
    %638 = vmatpush.msra.mxu0 %v602
    %639 = vmatpush.msra.mxu0 %v601
    %640 = vmatpush.msra.mxu0 %v600
    %641 = vmatpush.msra.mxu0 %v599
    %642 = vmatpush.msra.mxu0 %v598
    %643 = vmatpush.msra.mxu0 %v597
    %644 = vmatpush.msra.mxu0 %v596
    %645 = vmatpush.msra.mxu0 %v595
    %646 = vmatpush.msra.mxu0 %v594
    %647 = vmatpush.msra.mxu0 %v593
    %648 = vmatpush.msra.mxu0 %v592
    %649 = vmatpush.msra.mxu0 %v591
    %650 = vmatpush.msra.mxu0 %v590
    %651 = vmatpush.msra.mxu0 %v589
    %652 = vmatpush.msra.mxu0 %v588
    %653 = vmatmul.f32.gmra.mxu0 %v633
    %v654 = vpop.f32.mrf.mxu0
    %v655 = vadd.f32 0.0, %v654
    %656 = vmatmul.f32.gmra.mxu0 %v634
    %v657 = vpop.f32.mrf.mxu0
    %v658 = vadd.f32 0.0, %v657
    %659 = vmatmul.f32.gmra.mxu0 %v635
    %v660 = vpop.f32.mrf.mxu0
    %v661 = vadd.f32 0.0, %v660
    %662 = vmatmul.f32.gmra.mxu0 %v636
    %v663 = vpop.f32.mrf.mxu0
    %v664 = vadd.f32 0.0, %v663
    %665 = vdwg.mxu0
    %v666 = vld [vmem:[%s10] sm:$0x1]
    %v668 = vperm.slane %v666, 0
    %v670 = vmul.f32 %v584, %v668
    %v671 = vmul.f32 %v585, %v668
    %v672 = vmul.f32 %v586, %v668
    %v673 = vmul.f32 %v587, %v668
    %674 = vmatpush.msra.mxu0 %v603
    %675 = vmatpush.msra.mxu0 %v602
    %676 = vmatpush.msra.mxu0 %v601
    %677 = vmatpush.msra.mxu0 %v600
    %678 = vmatpush.msra.mxu0 %v599
    %679 = vmatpush.msra.mxu0 %v598
    %680 = vmatpush.msra.mxu0 %v597
    %681 = vmatpush.msra.mxu0 %v596
    %682 = vmatpush.msra.mxu0 %v595
    %683 = vmatpush.msra.mxu0 %v594
    %684 = vmatpush.msra.mxu0 %v593
    %685 = vmatpush.msra.mxu0 %v592
    %686 = vmatpush.msra.mxu0 %v591
    %687 = vmatpush.msra.mxu0 %v590
    %688 = vmatpush.msra.mxu0 %v589
    %689 = vmatpush.msra.mxu0 %v588
    %690 = vmatmul.f32.gmra.mxu0 %v670
    %v691 = vpop.f32.mrf.mxu0
    %v692 = vadd.f32 0.0, %v691
    %693 = vmatmul.f32.gmra.mxu0 %v671
    %v694 = vpop.f32.mrf.mxu0
    %v695 = vadd.f32 0.0, %v694
    %696 = vmatmul.f32.gmra.mxu0 %v672
    %v697 = vpop.f32.mrf.mxu0
    %v698 = vadd.f32 0.0, %v697
    %699 = vmatmul.f32.gmra.mxu0 %v673
    %v700 = vpop.f32.mrf.mxu0
    %v701 = vadd.f32 0.0, %v700
    %702 = vdwg.mxu0
    %v703 = vmax.f32 %v622, 1e-30
    %v704 = vmax.f32 %v625, 1e-30
    %v705 = vmax.f32 %v628, 1e-30
    %v706 = vmax.f32 %v631, 1e-30
    %v707 = vlog2.pop %v703
    %v708 = vmul.f32 %v707, 0.6931472
    %v709 = vlog2.pop %v704
    %v710 = vmul.f32 %v709, 0.6931472
    %v711 = vlog2.pop %v705
    %v712 = vmul.f32 %v711, 0.6931472
    %v713 = vlog2.pop %v706
    %v714 = vmul.f32 %v713, 0.6931472
    %v715 = vsel %vm456, %v708, 0.0
    %v716 = vsel %vm456, %v710, 0.0
    %v717 = vsel %vm456, %v712, 0.0
    %v718 = vsel %vm456, %v714, 0.0
    %v719 = vmul.f32 %v584, %v560
    %v720 = vmul.f32 %v585, %v561
    %v721 = vmul.f32 %v586, %v562
    %v722 = vmul.f32 %v587, %v563
    %723 = vadd.xlane.f32.xlu0 %v719
    %v724 = vpop.xlane.xlu0 %723
    %725 = vadd.xlane.f32.xlu0 %v720
    %v726 = vpop.xlane.xlu0 %725
    %727 = vadd.xlane.f32.xlu0 %v721
    %v728 = vpop.xlane.xlu0 %727
    %729 = vadd.xlane.f32.xlu0 %v722
    %v730 = vpop.xlane.xlu0 %729
    %731 = vadd.xlane.f32.xlu0 %v715
    %v732 = vpop.xlane.xlu0 %731
    %733 = vadd.xlane.f32.xlu0 %v716
    %v734 = vpop.xlane.xlu0 %733
    %735 = vadd.xlane.f32.xlu0 %v717
    %v736 = vpop.xlane.xlu0 %735
    %737 = vadd.xlane.f32.xlu0 %v718
    %v738 = vpop.xlane.xlu0 %737
    %v739 = vrcp.pop %v703
    %v740 = vmul.f32 %v703, %v739
    %v741 = vsub.f32 1.0, %v740
    %v742 = vmul.f32 %v739, %v741
    %v743 = vadd.f32 %v739, %v742
    %vm744 = vweird.f32 %v703
    %vm745 = vweird.f32 %v739
    %vm746 = vmor %vm744, %vm745
    %v747 = vsel %vm746, %v739, %v743
    %v748 = vand.u32 2147483647, %v703
    %vm749 = vcmp.eq.f32.partialorder %v748, 8.507059e+37
    %v750 = vand.u32 %v703, 2147483648
    %v751 = vor.u32 1.1754944e-38, %v750
    %v752 = vsel %vm749, %v751, %v747
    %v753 = vmul.f32 %v655, %v752
    %v754 = vrcp.pop %v704
    %v755 = vmul.f32 %v704, %v754
    %v756 = vsub.f32 1.0, %v755
    %v757 = vmul.f32 %v754, %v756
    %v758 = vadd.f32 %v754, %v757
    %vm759 = vweird.f32 %v704
    %vm760 = vweird.f32 %v754
    %vm761 = vmor %vm759, %vm760
    %v762 = vsel %vm761, %v754, %v758
    %v763 = vand.u32 2147483647, %v704
    %vm764 = vcmp.eq.f32.partialorder %v763, 8.507059e+37
    %v765 = vand.u32 %v704, 2147483648
    %v766 = vor.u32 1.1754944e-38, %v765
    %v767 = vsel %vm764, %v766, %v762
    %v768 = vmul.f32 %v658, %v767
    %v769 = vrcp.pop %v705
    %v770 = vmul.f32 %v705, %v769
    %v771 = vsub.f32 1.0, %v770
    %v772 = vmul.f32 %v769, %v771
    %v773 = vadd.f32 %v769, %v772
    %vm774 = vweird.f32 %v705
    %vm775 = vweird.f32 %v769
    %vm776 = vmor %vm774, %vm775
    %v777 = vsel %vm776, %v769, %v773
    %v778 = vand.u32 2147483647, %v705
    %vm779 = vcmp.eq.f32.partialorder %v778, 8.507059e+37
    %v780 = vand.u32 %v705, 2147483648
    %v781 = vor.u32 1.1754944e-38, %v780
    %v782 = vsel %vm779, %v781, %v777
    %v783 = vmul.f32 %v661, %v782
    %v784 = vrcp.pop %v706
    %v785 = vmul.f32 %v706, %v784
    %v786 = vsub.f32 1.0, %v785
    %v787 = vmul.f32 %v784, %v786
    %v788 = vadd.f32 %v784, %v787
    %vm789 = vweird.f32 %v706
    %vm790 = vweird.f32 %v784
    %vm791 = vmor %vm789, %vm790
    %v792 = vsel %vm791, %v784, %v788
    %v793 = vand.u32 2147483647, %v706
    %vm794 = vcmp.eq.f32.partialorder %v793, 8.507059e+37
    %v795 = vand.u32 %v706, 2147483648
    %v796 = vor.u32 1.1754944e-38, %v795
    %v797 = vsel %vm794, %v796, %v792
    %v798 = vmul.f32 %v664, %v797
    %799 = vadd.xlane.f32.xlu0 %v753
    %v800 = vpop.xlane.xlu0 %799
    %801 = vadd.xlane.f32.xlu0 %v768
    %v802 = vpop.xlane.xlu0 %801
    %803 = vadd.xlane.f32.xlu0 %v783
    %v804 = vpop.xlane.xlu0 %803
    %805 = vadd.xlane.f32.xlu0 %v798
    %v806 = vpop.xlane.xlu0 %805
    %v807 = vsub.f32 %v724, %v732
    %v808 = vsub.f32 %v726, %v734
    %v809 = vsub.f32 %v728, %v736
    %v810 = vsub.f32 %v730, %v738
    %v811 = vsub.f32 %v732, %v800
    %v812 = vsub.f32 %v734, %v802
    %v813 = vsub.f32 %v736, %v804
    %v814 = vsub.f32 %v738, %v806
    %vm815 = vcmp.eq.s32.totalorder %v440, 3
    %v816 = vsel %vm815, %v807, %v692
    %v817 = vsel %vm815, %v808, %v695
    %v818 = vsel %vm815, %v809, %v698
    %v819 = vsel %vm815, %v810, %v701
    %vm820 = vcmp.eq.s32.totalorder %v440, 4
    %v821 = vsel %vm820, %v811, %v816
    %v822 = vsel %vm820, %v812, %v817
    %v823 = vsel %vm820, %v813, %v818
    %v824 = vsel %vm820, %v814, %v819
    %825 = vst [vmem:[#allocation14] sm:$0xff] %v821
    %826 = vst [vmem:[#allocation14 + $0x8] sm:$0xff] %v822
    %827 = vst [vmem:[#allocation14 + $0x10] sm:$0xff] %v823
    %828 = vst [vmem:[#allocation14 + $0x18] sm:$0xff] %v824
    // Predicated region
    $region74: #{tpu_custom_call.1} parent=1 // pred_check
      _
    $region75: #{tpu_custom_call.1} parent=1 // pred_check_branch
      %830 = sbr.rel (0) target = $region77
    $region76: #{tpu_custom_call.1} parent=1 // pred_region
      %832 = vsyncadd [#allocation4], 0
      %s833 = sshll.u32 [#allocation14], 4
      %s834 = int_to_ptr.vmem [resolvable:$true] %s833
      %s835 = sshll.u32 %s11, 4
      %s836 = int_to_ptr.hbm [resolvable:$true] %s835
      %841 = dma.vmem_to_hbm [thread:$0]  %s834, 512, %s836, [#allocation4], 128, 128, 8
    $region77: #{tpu_custom_call.1} parent=1 // pred_fallthru
      _
    // Predicated region
    $region78: #{tpu_custom_call.1} parent=1 // pred_check
      _
    $region79: #{tpu_custom_call.1} parent=1 // pred_check_branch
      %843 = sbr.rel (0) target = $region81
    $region80: #{tpu_custom_call.1} parent=1 // pred_region
      %845 = dma.done [#allocation4], 512
    $region81: #{tpu_custom_call.1} parent=1 // pred_fallthru
      _
    %846 = vsyncpa [#allocation3], 1
    %847 = vsyncpa [#allocation6], 1
    %848 = vsyncpa [#allocation9], 1
    %849 = vsyncpa [#allocation12], 1
    %850 = vsyncpa [#allocation4], 1

</llo_original>
